<compile_context>
chip_gen: v5e
topology: v5e:2x2
jax: 0.10.0
libtpu: 0.0.40
codegen_flags: <defaults>
</compile_context>

<pallas_src>
import functools

import numpy as np
import jax
import jax.numpy as jnp
from jax.experimental import pallas as pl
from jax.experimental.pallas import tpu as pltpu

BN_EPS = 1e-5


# ----------------------------------------------------------------------------
# Pallas kernels
# ----------------------------------------------------------------------------
def _mm_kernel(x_ref, w_ref, s_ref, b_ref, o_ref, acc_ref, *, act):
    """Tiled matmul with f32 VMEM accumulator; epilogue on last K step."""
    @pl.when(pl.program_id(2) == 0)
    def _init():
        acc_ref[...] = jnp.zeros_like(acc_ref)

    acc_ref[...] += jnp.dot(x_ref[...], w_ref[...],
                            preferred_element_type=jnp.float32)

    @pl.when(pl.program_id(2) == pl.num_programs(2) - 1)
    def _fin():
        y = acc_ref[...] * s_ref[...] + b_ref[...]
        if act == "relu":
            y = jnp.maximum(y, 0.0)
        elif act == "leaky_relu":
            y = jnp.where(y > 0, y, 0.01 * y)      # nn.LeakyReLU default slope
        elif act == "sigmoid":
            y = jax.nn.sigmoid(y)
        o_ref[...] = y.astype(o_ref.dtype)


def _mm_res_kernel(x_ref, w_ref, s_ref, b_ref, r_ref, o_ref, acc_ref):
    """Same as _mm_kernel but fuses residual add + ReLU into the epilogue."""
    @pl.when(pl.program_id(2) == 0)
    def _init():
        acc_ref[...] = jnp.zeros_like(acc_ref)

    acc_ref[...] += jnp.dot(x_ref[...], w_ref[...],
                            preferred_element_type=jnp.float32)

    @pl.when(pl.program_id(2) == pl.num_programs(2) - 1)
    def _fin():
        y = acc_ref[...] * s_ref[...] + b_ref[...] + r_ref[...]
        o_ref[...] = jnp.maximum(y, 0.0).astype(o_ref.dtype)


def _se_kernel(x_ref, w1_ref, b1_ref, w2_ref, b2_ref, o_ref):
    """Fused SE excitation: GAP -> fc1 -> ReLU -> fc2 -> sigmoid -> x*ex + x."""
    x = x_ref[...]                                               # (B, HW, C)
    sq = jnp.mean(x, axis=1)                                     # (B, C) global avg pool
    h = jnp.sum(sq * w1_ref[...], axis=1, keepdims=True) + b1_ref[...]   # (B, 1)
    h = jnp.maximum(h, 0.0)
    ex = jax.nn.sigmoid(h * w2_ref[...] + b2_ref[...])           # (B, C)
    o_ref[...] = x * ex[:, None, :] + x


def _upsample_kernel(a_ref, x_ref, o_ref):
    """Bilinear upsample via interp matrix A: o[b,p,c] = sum_q A[p,q] x[b,q,c]."""
    a = a_ref[...]                                               # (P, Q)
    B, Q, C = x_ref.shape
    P = a.shape[0]
    for b in range(B):                                           # small, static
        xb = x_ref[b]                                            # (Q, C)
        acc = jnp.zeros((P, C), jnp.float32)
        for q in range(Q):
            acc = acc + a[:, q:q + 1] * xb[q:q + 1, :]
        o_ref[b] = acc


# ----------------------------------------------------------------------------
# Pallas call factories (cached so identical shapes compile once)
# ----------------------------------------------------------------------------
@functools.lru_cache(maxsize=None)
def _mm_callable(Mp, K, Np, tm, tn, tk, act, has_res):
    grid = (Mp // tm, Np // tn, K // tk)
    in_specs = [
        pl.BlockSpec((tm, tk), lambda i, j, k: (i, k)),
        pl.BlockSpec((tk, tn), lambda i, j, k: (k, j)),
        pl.BlockSpec((1, tn), lambda i, j, k: (0, j)),
        pl.BlockSpec((1, tn), lambda i, j, k: (0, j)),
    ]
    if has_res:
        in_specs.append(pl.BlockSpec((tm, tn), lambda i, j, k: (i, j)))
        kernel = _mm_res_kernel
    else:
        kernel = functools.partial(_mm_kernel, act=act)
    fn = pl.pallas_call(
        kernel,
        out_shape=jax.ShapeDtypeStruct((Mp, Np), jnp.float32),
        grid_spec=pltpu.PrefetchScalarGridSpec(
            num_scalar_prefetch=0,
            grid=grid,
            in_specs=in_specs,
            out_specs=pl.BlockSpec((tm, tn), lambda i, j, k: (i, j)),
            scratch_shapes=[pltpu.VMEM((tm, tn), jnp.float32)],
        ),
        compiler_params=pltpu.CompilerParams(
            dimension_semantics=("parallel", "parallel", "arbitrary"),
            vmem_limit_bytes=48 << 20,      # v7x-safe (64 MiB physical per TC)
        ),
    )
    return jax.jit(fn)


@functools.lru_cache(maxsize=None)
def _se_callable(B, HW, C):
    fn = pl.pallas_call(
        _se_kernel,
        out_shape=jax.ShapeDtypeStruct((B, HW, C), jnp.float32),
        grid=(1,),
        in_specs=[
            pl.BlockSpec((B, HW, C), lambda i: (0, 0, 0)),
            pl.BlockSpec((1, C), lambda i: (0, 0)),
            pl.BlockSpec((1, 1), lambda i: (0, 0)),
            pl.BlockSpec((1, C), lambda i: (0, 0)),
            pl.BlockSpec((1, C), lambda i: (0, 0)),
        ],
        out_specs=pl.BlockSpec((B, HW, C), lambda i: (0, 0, 0)),
        compiler_params=pltpu.CompilerParams(vmem_limit_bytes=32 << 20),
    )
    return jax.jit(fn)


@functools.lru_cache(maxsize=None)
def _upsample_callable(B, Q, C, P):
    fn = pl.pallas_call(
        _upsample_kernel,
        out_shape=jax.ShapeDtypeStruct((B, P, C), jnp.float32),
        grid=(1,),
        in_specs=[
            pl.BlockSpec((P, Q), lambda i: (0, 0)),
            pl.BlockSpec((B, Q, C), lambda i: (0, 0, 0)),
        ],
        out_specs=pl.BlockSpec((B, P, C), lambda i: (0, 0, 0)),
        compiler_params=pltpu.CompilerParams(vmem_limit_bytes=32 << 20),
    )
    return jax.jit(fn)


# ----------------------------------------------------------------------------
# Tile selection helpers
# ----------------------------------------------------------------------------
def _choose_tm(M):
    for cand in (256, 128, 64, 32, 16, 8):
        if M % cand == 0:
            return cand
    return M                      # full-M block (allowed when == array dim)


def _choose_tk(K):
    if K % 128 != 0:
        return K                  # full-K block: no activation K-padding needed
    for cand in (512, 384, 256, 128):
        if K % cand == 0:
            return cand
    return 128


def matmul_affine_act(x, w, scale=None, shift=None, act="none", residual=None):
    """y = act((x @ w) * scale + shift [+ residual]) via the fused Pallas matmul.

    x: (M, K), w: (K, N), scale/shift: (N,), residual: (M, N) or None."""
    M, K = x.shape
    K2, N = w.shape
    assert K == K2
    if scale is None:
        scale = jnp.ones((N,), jnp.float32)
    if shift is None:
        shift = jnp.zeros((N,), jnp.float32)

    # Lane-dense output: pad N (Cout) up to a multiple of 128.
    Np = ((max(N, 128) + 127) // 128) * 128
    if Np != N:
        assert residual is None, "residual fusion expects lane-aligned channels"
        w = jnp.pad(w, ((0, 0), (0, Np - N)))
        scale = jnp.pad(scale, (0, Np - N), constant_values=1.0)
        shift = jnp.pad(shift, (0, Np - N))

    tm = _choose_tm(M)
    Mp = pl.cdiv(M, tm) * tm
    if Mp != M:
        x = jnp.pad(x, ((0, Mp - M), (0, 0)))
        if residual is not None:
            residual = jnp.pad(residual, ((0, Mp - M), (0, 0)))
    tk = _choose_tk(K)
    tn = 256 if Np % 256 == 0 else 128

    fn = _mm_callable(Mp, K, Np, tm, tn, tk, act, residual is not None)
    args = [
        x.astype(jnp.bfloat16),                 # bf16 MXU inputs, f32 accumulate
        w.astype(jnp.bfloat16),
        scale.reshape(1, Np).astype(jnp.float32),
        shift.reshape(1, Np).astype(jnp.float32),
    ]
    if residual is not None:
        args.append(residual.astype(jnp.float32))
    out = fn(*args)
    if Mp != M:
        out = out[:M]
    if Np != N:
        out = out[:, :N]
    return out


# ----------------------------------------------------------------------------
# conv2d = im2col (bf16, streamed over the K grid axis) + fused Pallas matmul
# ----------------------------------------------------------------------------
def conv2d(x, w, *, stride=1, padding=0, dilation=1,
           scale=None, shift=None, act="none", residual=None):
    """x: (N, H, W, Cin) NHWC;  w: (kh, kw, Cin, Cout); residual: NHWC or None."""
    N, H, W, Cin = x.shape
    kh, kw, _, Cout = w.shape
    Hout = (H + 2 * padding - dilation * (kh - 1) - 1) // stride + 1
    Wout = (W + 2 * padding - dilation * (kw - 1) - 1) // stride + 1

    xb = x.astype(jnp.bfloat16)                 # halve im2col HBM traffic
    if padding > 0:
        xb = jnp.pad(xb, ((0, 0), (padding, padding), (padding, padding), (0, 0)))
    cols = []
    for i in range(kh):
        for j in range(kw):
            hi, wi = i * dilation, j * dilation
            cols.append(
                xb[:, hi:hi + stride * (Hout - 1) + 1:stride,
                       wi:wi + stride * (Wout - 1) + 1:stride, :]
            )
    xcol = cols[0] if len(cols) == 1 else jnp.concatenate(cols, axis=-1)
    xmat = xcol.reshape(N * Hout * Wout, kh * kw * Cin)
    wmat = w.reshape(kh * kw * Cin, Cout)
    rmat = None
    if residual is not None:
        rmat = residual.reshape(N * Hout * Wout, Cout)
    y = matmul_affine_act(xmat, wmat, scale, shift, act, residual=rmat)
    return y.reshape(N, Hout, Wout, Cout)


# ----------------------------------------------------------------------------
# Parameters (deterministic synthetic init)
# ----------------------------------------------------------------------------
class ParamGen:
    def __init__(self, seed=0):
        self._key = jax.random.PRNGKey(seed)

    def _next(self):
        self._key, k = jax.random.split(self._key)
        return k

    def conv_w(self, kh, kw, cin, cout):
        fan_in = kh * kw * cin
        std = 0.5 * (2.0 / fan_in) ** 0.5
        return std * jax.random.normal(self._next(), (kh, kw, cin, cout), jnp.float32)

    def conv_b(self, kh, kw, cin, cout):
        bound = 1.0 / (kh * kw * cin) ** 0.5
        return jax.random.uniform(self._next(), (cout,), jnp.float32, -bound, bound)

    def linear(self, fin, fout):
        bound = 1.0 / fin ** 0.5
        w = jax.random.uniform(self._next(), (fin, fout), jnp.float32, -bound, bound)
        b = jax.random.uniform(self._next(), (fout,), jnp.float32, -bound, bound)
        return w, b


def bn_fold(cout, conv_bias=None):
    """Fold inference-mode BatchNorm (default stats) + optional conv bias into (scale, shift)."""
    gamma = jnp.ones((cout,), jnp.float32)
    beta = jnp.zeros((cout,), jnp.float32)
    mean = jnp.zeros((cout,), jnp.float32)
    var = jnp.ones((cout,), jnp.float32)
    scale = gamma / jnp.sqrt(var + BN_EPS)
    bias = jnp.zeros((cout,), jnp.float32) if conv_bias is None else conv_bias
    shift = (bias - mean) * scale + beta
    return scale, shift


def build_params(in_channels=4, num_classes=16):
    pg = ParamGen(0)
    P = {}
    # layer0 (in_channels != 3 path): Conv2d(in, 64, 3, stride=2, pad=1, bias=False) + BN + LeakyReLU
    P["layer0_w"] = pg.conv_w(3, 3, in_channels, 64)

    def make_layer(inplanes, planes, blocks, stride, dilation):
        layer = []
        for b in range(blocks):
            s = stride if b == 0 else 1
            blk = {
                "conv1_w": pg.conv_w(1, 1, inplanes, planes),
                "conv2_w": pg.conv_w(3, 3, planes, planes),
                "conv3_w": pg.conv_w(1, 1, planes, planes * 4),
                "stride": s,
                "dilation": dilation,
            }
            if b == 0 and (stride != 1 or inplanes != planes * 4):
                blk["down_w"] = pg.conv_w(1, 1, inplanes, planes * 4)
            layer.append(blk)
            inplanes = planes * 4
        return layer, inplanes

    # resnet50: blocks [3,4,6,3]; change_dilation([1,1,1,2,4]) -> layer3 dil=2, layer4 dil=4
    inpl = 64
    P["layer1"], inpl = make_layer(inpl, 64, 3, 1, 1)
    P["layer2"], inpl = make_layer(inpl, 128, 4, 2, 1)
    P["layer3"], inpl = make_layer(inpl, 256, 6, 2, 2)
    P["layer4"], inpl = make_layer(inpl, 512, 3, 2, 4)

    # ChDecrease: Conv2d(2048, 512, 1) with bias
    P["chd_w"] = pg.conv_w(1, 1, 2048, 512)
    P["chd_b"] = pg.conv_b(1, 1, 2048, 512)

    # SEM(512, 16)
    P["sem_c1_w"] = pg.conv_w(3, 3, 512, 16)
    P["sem_c1_b"] = pg.conv_b(3, 3, 512, 16)
    P["sem_c2_w"] = pg.conv_w(1, 1, 16, 16)
    P["sem_c2_b"] = pg.conv_b(1, 1, 16, 16)
    P["fc1_w"], P["fc1_b"] = pg.linear(16, 1)   # Linear(16, 16 // 16)
    P["fc2_w"], P["fc2_b"] = pg.linear(1, 16)   # Linear(1, 16)

    # out_conv: Conv2d(num_classes, num_classes, 3, padding=1, bias=True)
    P["out_w"] = pg.conv_w(3, 3, num_classes, num_classes)
    P["out_b"] = pg.conv_b(3, 3, num_classes, num_classes)
    return P


# ----------------------------------------------------------------------------
# Network forward (glue orchestrating Pallas kernels)
# ----------------------------------------------------------------------------
def bottleneck(x, blk):
    c1 = blk["conv1_w"].shape[-1]
    c2 = blk["conv2_w"].shape[-1]
    c3 = blk["conv3_w"].shape[-1]
    d = blk["dilation"]

    s, t = bn_fold(c1)
    out = conv2d(x, blk["conv1_w"], scale=s, shift=t, act="relu")
    s, t = bn_fold(c2)
    out = conv2d(out, blk["conv2_w"], stride=blk["stride"], padding=d, dilation=d,
                 scale=s, shift=t, act="relu")

    if "down_w" in blk:
        s, t = bn_fold(c3)
        identity = conv2d(x, blk["down_w"], stride=blk["stride"], scale=s, shift=t, act="none")
    else:
        identity = x

    # conv3 + BN + residual add + ReLU, all fused in one matmul kernel epilogue
    s, t = bn_fold(c3)
    out = conv2d(out, blk["conv3_w"], scale=s, shift=t, act="none", residual=identity)
    return out


def sem_forward(x, P):
    s, t = bn_fold(16, P["sem_c1_b"])
    x = conv2d(x, P["sem_c1_w"], padding=1, scale=s, shift=t, act="relu")
    s, t = bn_fold(16, P["sem_c2_b"])
    x = conv2d(x, P["sem_c2_w"], scale=s, shift=t, act="relu")
    N, H, W, C = x.shape
    fn = _se_callable(N, H * W, C)
    out = fn(
        x.reshape(N, H * W, C).astype(jnp.float32),
        P["fc1_w"].reshape(1, C).astype(jnp.float32),   # (16,1) column -> (1,16) row
        P["fc1_b"].reshape(1, 1).astype(jnp.float32),
        P["fc2_w"].reshape(1, C).astype(jnp.float32),   # (1,16)
        P["fc2_b"].reshape(1, C).astype(jnp.float32),
    )
    return out.reshape(N, H, W, C)


def _interp_matrix(n_in, n_out):
    """1-D bilinear interpolation matrix, align_corners=True."""
    A = np.zeros((n_out, n_in), np.float32)
    if n_out == 1 or n_in == 1:
        A[:, 0] = 1.0
        return A
    for i in range(n_out):
        src = i * (n_in - 1) / (n_out - 1)
        i0 = min(int(np.floor(src)), n_in - 1)
        i1 = min(i0 + 1, n_in - 1)
        w1 = src - i0
        A[i, i0] += 1.0 - w1
        A[i, i1] += w1
    return A


def bilinear_upsample(x, Hout, Wout):
    """F.interpolate(..., mode='bilinear', align_corners=True), one fused kernel."""
    B, h, w, C = x.shape
    Ah = _interp_matrix(h, Hout)                            # (Hout, h)
    Aw = _interp_matrix(w, Wout)                            # (Wout, w)
    A = np.einsum("ia,jb->ijab", Ah, Aw).reshape(Hout * Wout, h * w).astype(np.float32)
    fn = _upsample_callable(B, h * w, C, Hout * Wout)
    out = fn(jnp.asarray(A), x.reshape(B, h * w, C).astype(jnp.float32))
    return out.reshape(B, Hout, Wout, C)


def senet_forward(x_nchw, P):
    N, Cin, H, W = x_nchw.shape
    x = jnp.transpose(x_nchw, (0, 2, 3, 1)).astype(jnp.float32)   # NCHW -> NHWC

    # ---- backbone (Resnet) ----
    s, t = bn_fold(64)
    x = conv2d(x, P["layer0_w"], stride=2, padding=1, scale=s, shift=t, act="leaky_relu")
    for name in ("layer1", "layer2", "layer3", "layer4"):
        for blk in P[name]:
            x = bottleneck(x, blk)
    x = conv2d(x, P["chd_w"], shift=P["chd_b"], act="none")        # ChDecrease 2048 -> 512

    # ---- SEM ----
    se = sem_forward(x, P)

    # ---- bilinear upsample to input size ----
    se = bilinear_upsample(se, H, W)

    # ---- out_conv ----
    out = conv2d(se, P["out_w"], padding=1, shift=P["out_b"], act="none")
    return jnp.transpose(out, (0, 3, 1, 2))                        # NHWC -> NCHW


# ----------------------------------------------------------------------------
if __name__ == "__main__":
    inplanes = 4        # in_channels != 3 -> custom layer0 path (no pretrained stem)
    num_classes = 16    # matches SEM's class count (16) so out_conv is valid
    x = jax.random.normal(jax.random.PRNGKey(0), (2, inplanes, 32, 32), jnp.float32)

    params = build_params(in_channels=inplanes, num_classes=num_classes)
    out = senet_forward(x, params)
    out = jax.block_until_ready(out)

    assert out.shape == (2, num_classes, 32, 32), out.shape
    assert bool(jnp.all(jnp.isfinite(out)))
    print("KERNEL_OK")
</pallas_src>

<mosaic_0001>
module attributes {stable_mosaic.version = 11 : i64} {
  func.func @_mm_kernel(%arg0: i32, %arg1: i32, %arg2: i32, %arg3: memref<256x36xbf16, #tpu.memory_space<vmem>>, %arg4: memref<36x128xbf16, #tpu.memory_space<vmem>>, %arg5: memref<1x128xf32, #tpu.memory_space<vmem>>, %arg6: memref<1x128xf32, #tpu.memory_space<vmem>>, %arg7: memref<256x128xf32, #tpu.memory_space<vmem>>, %arg8: memref<256x128xf32, #tpu.memory_space<vmem>>) attributes {dimension_semantics = [#tpu.dimension_semantics<parallel>, #tpu.dimension_semantics<parallel>, #tpu.dimension_semantics<arbitrary>], iteration_bounds = array<i64: 2, 1, 1>, scalar_prefetch = 0 : i64, scratch_operands = 1 : i64, tpu.core_type = #tpu.core_type<tc>, window_params = [{transform_indices = @transform_0, window_bounds = array<i64: 256, 36>}, {transform_indices = @transform_1, window_bounds = array<i64: 36, 128>}, {transform_indices = @transform_2, window_bounds = array<i64: 1, 128>}, {transform_indices = @transform_3, window_bounds = array<i64: 1, 128>}, {transform_indices = @transform_4, window_bounds = array<i64: 256, 128>}]} {
    %c0_i32 = arith.constant 0 : i32
    %0 = arith.cmpi eq, %arg2, %c0_i32 : i32
    %1 = arith.extui %0 : i1 to i32
    %c0_i32_0 = arith.constant 0 : i32
    %2 = arith.cmpi ne, %1, %c0_i32_0 : i32
    scf.if %2 {
      %cst_10 = arith.constant 0.000000e+00 : f32
      %12 = vector.broadcast %cst_10 : f32 to vector<256x128xf32>
      %c0_11 = arith.constant 0 : index
      %c0_12 = arith.constant 0 : index
      %13 = vector.load %arg8[%c0_11, %c0_12] : memref<256x128xf32, #tpu.memory_space<vmem>>, vector<256x128xf32>
      tpu.vector_store %arg8[%c0_11, %c0_12], %12 {strides = array<i32>} : memref<256x128xf32, #tpu.memory_space<vmem>>, vector<256x128xf32>,
    } else {
    }
    %c0 = arith.constant 0 : index
    %c0_1 = arith.constant 0 : index
    %3 = vector.load %arg8[%c0, %c0_1] : memref<256x128xf32, #tpu.memory_space<vmem>>, vector<256x128xf32>
    %c0_2 = arith.constant 0 : index
    %c0_3 = arith.constant 0 : index
    %4 = vector.load %arg3[%c0_2, %c0_3] : memref<256x36xbf16, #tpu.memory_space<vmem>>, vector<256x36xbf16>
    %c0_4 = arith.constant 0 : index
    %c0_5 = arith.constant 0 : index
    %5 = vector.load %arg4[%c0_4, %c0_5] : memref<36x128xbf16, #tpu.memory_space<vmem>>, vector<36x128xbf16>
    %cst = arith.constant dense<0.000000e+00> : vector<256x128xf32>
    %6 = tpu.matmul %4, %5, %cst {dimension_numbers = #tpu.dot_dimension_numbers<[1], [0], [0], [1], [0, 0, 1, 1], [], []>} : vector<256x36xbf16>, vector<36x128xbf16>, vector<256x128xf32> -> vector<256x128xf32>
    %7 = arith.addf %3, %6 : vector<256x128xf32>
    %c0_6 = arith.constant 0 : index
    %c0_7 = arith.constant 0 : index
    %8 = vector.load %arg8[%c0_6, %c0_7] : memref<256x128xf32, #tpu.memory_space<vmem>>, vector<256x128xf32>
    tpu.vector_store %arg8[%c0_6, %c0_7], %7 {strides = array<i32>} : memref<256x128xf32, #tpu.memory_space<vmem>>, vector<256x128xf32>,
    %c0_i32_8 = arith.constant 0 : i32
    %9 = arith.cmpi eq, %arg2, %c0_i32_8 : i32
    %10 = arith.extui %9 : i1 to i32
    %c0_i32_9 = arith.constant 0 : i32
    %11 = arith.cmpi ne, %10, %c0_i32_9 : i32
    scf.if %11 {
      %c0_10 = arith.constant 0 : index
      %c0_11 = arith.constant 0 : index
      %12 = vector.load %arg8[%c0_10, %c0_11] : memref<256x128xf32, #tpu.memory_space<vmem>>, vector<256x128xf32>
      %c0_12 = arith.constant 0 : index
      %c0_13 = arith.constant 0 : index
      %13 = vector.load %arg5[%c0_12, %c0_13] : memref<1x128xf32, #tpu.memory_space<vmem>>, vector<1x128xf32>
      %14 = vector.broadcast %13 : vector<1x128xf32> to vector<256x128xf32>
      %15 = arith.mulf %12, %14 : vector<256x128xf32>
      %c0_14 = arith.constant 0 : index
      %c0_15 = arith.constant 0 : index
      %16 = vector.load %arg6[%c0_14, %c0_15] : memref<1x128xf32, #tpu.memory_space<vmem>>, vector<1x128xf32>
      %17 = vector.broadcast %16 : vector<1x128xf32> to vector<256x128xf32>
      %18 = arith.addf %15, %17 : vector<256x128xf32>
      %cst_16 = arith.constant 0.000000e+00 : f32
      %19 = vector.broadcast %cst_16 : f32 to vector<256x128xf32>
      %20 = arith.cmpf ogt, %18, %19 : vector<256x128xf32>
      %cst_17 = arith.constant 0.00999999977 : f32
      %21 = vector.broadcast %cst_17 : f32 to vector<256x128xf32>
      %22 = arith.mulf %21, %18 : vector<256x128xf32>
      %23 = arith.select %20, %18, %22 : vector<256x128xi1>, vector<256x128xf32>
      %c0_18 = arith.constant 0 : index
      %c0_19 = arith.constant 0 : index
      %24 = vector.load %arg7[%c0_18, %c0_19] : memref<256x128xf32, #tpu.memory_space<vmem>>, vector<256x128xf32>
      tpu.vector_store %arg7[%c0_18, %c0_19], %23 {strides = array<i32>} : memref<256x128xf32, #tpu.memory_space<vmem>>, vector<256x128xf32>,
    } else {
    }
    return
  }
  func.func @transform_0(%arg0: i32, %arg1: i32, %arg2: i32) -> (i32, i32) {
    %c0_i32 = arith.constant 0 : i32
    return %arg0, %arg2 : i32, i32
  }
  func.func @transform_1(%arg0: i32, %arg1: i32, %arg2: i32) -> (i32, i32) {
    %c0_i32 = arith.constant 0 : i32
    return %arg2, %arg1 : i32, i32
  }
  func.func @transform_2(%arg0: i32, %arg1: i32, %arg2: i32) -> (i32, i32) {
    %c0_i32 = arith.constant 0 : i32
    %c0_i32_0 = arith.constant 0 : i32
    return %c0_i32, %arg1 : i32, i32
  }
  func.func @transform_3(%arg0: i32, %arg1: i32, %arg2: i32) -> (i32, i32) {
    %c0_i32 = arith.constant 0 : i32
    %c0_i32_0 = arith.constant 0 : i32
    return %c0_i32, %arg1 : i32, i32
  }
  func.func @transform_4(%arg0: i32, %arg1: i32, %arg2: i32) -> (i32, i32) {
    %c0_i32 = arith.constant 0 : i32
    return %arg0, %arg1 : i32, i32
  }
}

</mosaic_0001>

<llo_original>
// kernel: tpu_custom_call.1
$region0: #{tpu_custom_call.1}
  #allocation0 [shape = 'u32[]', space=smem, size = 0x4, offset = 0x4, fixed_abs, tag = 'smem constant byte address 0x4 - core index']
  #allocation1 [shape = 'u32[72,128]{1,0:T(1,128)}', space=vmem, size = 0x9000, scoped, tag = 'internal scratch']
  #allocation2 [shape = 'f32[256,128]{1,0:T(8,128)}', space=vmem, size = 0x20000, scoped, tag = 'scratch operand']
  %s0 = inlined_call_operand.vmem [shape: bf16[512,36], index: 0, kind: input, shape index: {}]
  %s1 = inlined_call_operand.vmem [shape: bf16[36,128], index: 1, kind: input, shape index: {}]
  %s2 = inlined_call_operand.vmem [shape: f32[1,128], index: 2, kind: input, shape index: {}]
  %s3 = inlined_call_operand.vmem [shape: f32[1,128], index: 3, kind: input, shape index: {}]
  %s4 = inlined_call_operand.hbm [shape: f32[512,128], index: 4, kind: output, shape index: {}]
  %s5 = sld [smem:[#allocation0]]
  $region57: #{tpu_custom_call.1} parent=0
    _
  %s7 = ssub.s32 1, %s5
  %s8 = scalar_select 0, %s7, %s5
  $region1: #{tpu_custom_call.1} parent=0
    #allocation3 [shape = 'u8[262144]{0}', space=vmem, size = 0x40000, scoped, tag = 'output window, operand 0']
    #allocation4 [shape = 's32[2]{0}', space=sflag, size = 0x8, scoped, tag = 'scoped memory for tpu_custom_call.1']
    %9 = vsyncpa [#allocation4], 0
    %s10 = scalar_lea.sflag [#allocation4], 1
    %11 = vsyncpa %s10, 0
    loop: start=0, step=1, limit=4
    $region2: #{tpu_custom_call.1} parent=1 // loop_pre_header
      _
    $region3: #{tpu_custom_call.1} parent=1 // loop_header
      %s13 = sphi 0, %s17
      %p14 = scmp.ge.s32.totalorder %s13, 4
      %s20 = sphi 0, %s39
      %s21 = sphi 0, %s35
      %s22 = sphi 0, %s31
      %s23 = sphi 0, %s20
      %s24 = sphi 0, %s21
      %s25 = sphi 0, %s22
      %s26 = sphi 0, %s23
      %s27 = sphi 0, %s24
      %s28 = sphi 0, %s25
      %s44 = sphi 0, %s46
      %s47 = sphi 0, %s44
      %s48 = sphi 0, %s47
      %s64 = sphi 0, %s48
      %s72 = sphi 0, %s74
      %s75 = sphi 0, %s72
      %s76 = sphi 0, %s75
      %s92 = sphi 0, %s76
      %s98 = sphi 0, %s100
      %s101 = sphi 0, %s98
      %s102 = sphi 0, %s101
      %s118 = sphi 0, %s102
      %s124 = sphi 0, %s126
      %s127 = sphi 0, %s124
      %s128 = sphi 0, %s127
      %s144 = sphi 0, %s128
      %s152 = sphi 0, %s154
      %s155 = sphi 0, %s152
      %s156 = sphi 0, %s155
      %s172 = sphi 0, %s156
    $region4: #{tpu_custom_call.1} parent=1 // loop_header_branch
      %16 = sbr.rel (%p14) target = $region8
    $region5: #{tpu_custom_call.1} parent=1 // loop_body
      %s18 = ssub.s32 %s13, 1
      %s19 = ssub.s32 %s13, 2
      %s29 = sadd.s32 1, %s22
      %p30 = scmp.ge.s32.totalorder %s29, 1
      %s31 = scalar_select %p30, 0, %s29
      %s32 = sadd.s32 1, %s21
      %s33 = scalar_select %p30, %s32, %s21
      %p34 = scmp.ge.s32.totalorder %s33, 1
      %s35 = scalar_select %p34, 0, %s33
      %s36 = sadd.s32 1, %s20
      %s37 = scalar_select %p34, %s36, %s20
      %p38 = scmp.ge.s32.totalorder %s37, 2
      %s39 = scalar_select %p38, 0, %s37
      %s40 = ssub.s32 %s20, %s39
      %s41 = ssub.s32 %s22, %s31
      %s42 = sor.u32 %s40, %s41
      %p43 = scmp.eq.s32.totalorder %s42, 0
      %s45 = sadd.s32 %s44, 1
      %s46 = scalar_select %p43, %s44, %s45
      %p49 = pneg %p43
      %p50 = scmp.eq.s32.totalorder %s13, 1
      %p51 = por %p49, %p50
      %p52 = scmp.ne.s32.totalorder %s44, %s47
      %p53 = scmp.eq.s32.totalorder %s13, 0
      %p54 = por %p52, %p53
      %p55 = scmp.ne.s32.totalorder %s44, %s47
      %p56 = scmp.eq.s32.totalorder %s18, 1
      %p57 = por %p55, %p56
      %p58 = scmp.ne.s32.totalorder %s47, %s48
      %p59 = scmp.eq.s32.totalorder %s18, 0
      %p60 = por %p58, %p59
      %p61 = scmp.ne.s32.totalorder %s47, %s48
      %p62 = scmp.eq.s32.totalorder %s19, 1
      %p63 = por %p61, %p62
      %p65 = scmp.ne.s32.totalorder %s48, %s64
      %p66 = scmp.eq.s32.totalorder %s19, 0
      %p67 = por %p65, %p66
      %s68 = ssub.s32 %s22, %s31
      %s69 = ssub.s32 %s21, %s35
      %s70 = sor.u32 %s68, %s69
      %p71 = scmp.eq.s32.totalorder %s70, 0
      %s73 = sadd.s32 %s72, 1
      %s74 = scalar_select %p71, %s72, %s73
      %p77 = pneg %p71
      %p78 = scmp.eq.s32.totalorder %s13, 1
      %p79 = por %p77, %p78
      %p80 = scmp.ne.s32.totalorder %s72, %s75
      %p81 = scmp.eq.s32.totalorder %s13, 0
      %p82 = por %p80, %p81
      %p83 = scmp.ne.s32.totalorder %s72, %s75
      %p84 = scmp.eq.s32.totalorder %s18, 1
      %p85 = por %p83, %p84
      %p86 = scmp.ne.s32.totalorder %s75, %s76
      %p87 = scmp.eq.s32.totalorder %s18, 0
      %p88 = por %p86, %p87
      %p89 = scmp.ne.s32.totalorder %s75, %s76
      %p90 = scmp.eq.s32.totalorder %s19, 1
      %p91 = por %p89, %p90
      %p93 = scmp.ne.s32.totalorder %s76, %s92
      %p94 = scmp.eq.s32.totalorder %s19, 0
      %p95 = por %p93, %p94
      %s96 = ssub.s32 %s21, %s35
      %p97 = scmp.eq.s32.totalorder %s96, 0
      %s99 = sadd.s32 %s98, 1
      %s100 = scalar_select %p97, %s98, %s99
      %p103 = pneg %p97
      %p104 = scmp.eq.s32.totalorder %s13, 1
      %p105 = por %p103, %p104
      %p106 = scmp.ne.s32.totalorder %s98, %s101
      %p107 = scmp.eq.s32.totalorder %s13, 0
      %p108 = por %p106, %p107
      %p109 = scmp.ne.s32.totalorder %s98, %s101
      %p110 = scmp.eq.s32.totalorder %s18, 1
      %p111 = por %p109, %p110
      %p112 = scmp.ne.s32.totalorder %s101, %s102
      %p113 = scmp.eq.s32.totalorder %s18, 0
      %p114 = por %p112, %p113
      %p115 = scmp.ne.s32.totalorder %s101, %s102
      %p116 = scmp.eq.s32.totalorder %s19, 1
      %p117 = por %p115, %p116
      %p119 = scmp.ne.s32.totalorder %s102, %s118
      %p120 = scmp.eq.s32.totalorder %s19, 0
      %p121 = por %p119, %p120
      %s122 = ssub.s32 %s21, %s35
      %p123 = scmp.eq.s32.totalorder %s122, 0
      %s125 = sadd.s32 %s124, 1
      %s126 = scalar_select %p123, %s124, %s125
      %p129 = pneg %p123
      %p130 = scmp.eq.s32.totalorder %s13, 1
      %p131 = por %p129, %p130
      %p132 = scmp.ne.s32.totalorder %s124, %s127
      %p133 = scmp.eq.s32.totalorder %s13, 0
      %p134 = por %p132, %p133
      %p135 = scmp.ne.s32.totalorder %s124, %s127
      %p136 = scmp.eq.s32.totalorder %s18, 1
      %p137 = por %p135, %p136
      %p138 = scmp.ne.s32.totalorder %s127, %s128
      %p139 = scmp.eq.s32.totalorder %s18, 0
      %p140 = por %p138, %p139
      %p141 = scmp.ne.s32.totalorder %s127, %s128
      %p142 = scmp.eq.s32.totalorder %s19, 1
      %p143 = por %p141, %p142
      %p145 = scmp.ne.s32.totalorder %s128, %s144
      %p146 = scmp.eq.s32.totalorder %s19, 0
      %p147 = por %p145, %p146
      %s148 = ssub.s32 %s20, %s39
      %s149 = ssub.s32 %s21, %s35
      %s150 = sor.u32 %s148, %s149
      %p151 = scmp.eq.s32.totalorder %s150, 0
      %s153 = sadd.s32 %s152, 1
      %s154 = scalar_select %p151, %s152, %s153
      %p157 = pneg %p151
      %p158 = scmp.eq.s32.totalorder %s13, 1
      %p159 = por %p157, %p158
      %p160 = scmp.ne.s32.totalorder %s152, %s155
      %p161 = scmp.eq.s32.totalorder %s13, 0
      %p162 = por %p160, %p161
      %p163 = scmp.ne.s32.totalorder %s152, %s155
      %p164 = scmp.eq.s32.totalorder %s18, 1
      %p165 = por %p163, %p164
      %p166 = scmp.ne.s32.totalorder %s155, %s156
      %p167 = scmp.eq.s32.totalorder %s18, 0
      %p168 = por %p166, %p167
      %p169 = scmp.ne.s32.totalorder %s155, %s156
      %p170 = scmp.eq.s32.totalorder %s19, 1
      %p171 = por %p169, %p170
      %p173 = scmp.ne.s32.totalorder %s156, %s172
      %p174 = scmp.eq.s32.totalorder %s19, 0
      %p175 = por %p173, %p174
      %p176 = scmp.le.s32.totalorder 1, %s13
      %p177 = scmp.lt.s32.totalorder %s13, 3
      %p178 = pnand %p176, %p177
      %p179 = pneg %p178
      // Predicated region
      $region9: #{tpu_custom_call.1} parent=5 // pred_check
        _
      $region10: #{tpu_custom_call.1} parent=5 // pred_check_branch
        %181 = sbr.rel (%p178) target = $region12
      $region11: #{tpu_custom_call.1} parent=5 // pred_region
        %s182 = ssub.s32 %s13, 1
        // Predicated region
        $region13: #{tpu_custom_call.1} parent=11 // pred_check
          %p183 = pneg %p88
        $region14: #{tpu_custom_call.1} parent=11 // pred_check_branch
          %185 = sbr.rel (%p183) target = $region16
        $region15: #{tpu_custom_call.1} parent=11 // pred_region
          %s186 = smul.u32 5, %s25
          %p187 = scmp.lt.s32.totalorder %s186, 4
          %s188 = scalar_select %p187, %s186, 4
          %p189 = scmp.lt.s32.totalorder %s24, 0
          %s190 = scalar_select %p189, %s24, 0
          %s191 = sadd.s32 %s190, %s188
          %s192 = smul.addr %s191, 4
          %s193 = scalar_lea.vmem %s1, %s192
          %s194 = smul.u32 5, %s25
        $region16: #{tpu_custom_call.1} parent=11 // pred_fallthru
          _
        // Predicated region
        $region17: #{tpu_custom_call.1} parent=11 // pred_check
          %p195 = pneg %p114
        $region18: #{tpu_custom_call.1} parent=11 // pred_check_branch
          %197 = sbr.rel (%p195) target = $region20
        $region19: #{tpu_custom_call.1} parent=11 // pred_region
          %p198 = scmp.lt.s32.totalorder %s24, 0
          %s199 = scalar_select %p198, %s24, 0
          %s200 = scalar_lea.vmem %s2, %s199
        $region20: #{tpu_custom_call.1} parent=11 // pred_fallthru
          _
        // Predicated region
        $region21: #{tpu_custom_call.1} parent=11 // pred_check
          %p201 = pneg %p140
        $region22: #{tpu_custom_call.1} parent=11 // pred_check_branch
          %203 = sbr.rel (%p201) target = $region24
        $region23: #{tpu_custom_call.1} parent=11 // pred_region
          %p204 = scmp.lt.s32.totalorder %s24, 0
          %s205 = scalar_select %p204, %s24, 0
          %s206 = scalar_lea.vmem %s3, %s205
        $region24: #{tpu_custom_call.1} parent=11 // pred_fallthru
          _
      $region12: #{tpu_custom_call.1} parent=5 // pred_fallthru
        _
      %p207 = scmp.lt.s32.totalorder %s13, 2
      // Predicated region
      $region25: #{tpu_custom_call.1} parent=5 // pred_check
        %p208 = pneg %p207
      $region26: #{tpu_custom_call.1} parent=5 // pred_check_branch
        %210 = sbr.rel (%p208) target = $region28
      $region27: #{tpu_custom_call.1} parent=5 // pred_region
        // Predicated region
        $region29: #{tpu_custom_call.1} parent=27 // pred_check
          %p211 = pneg %p54
        $region30: #{tpu_custom_call.1} parent=27 // pred_check_branch
          %213 = sbr.rel (%p211) target = $region32
        $region31: #{tpu_custom_call.1} parent=27 // pred_region
          %s214 = smul.u32 32, %s20
          %p215 = scmp.lt.s32.totalorder %s214, 63
          %s216 = scalar_select %p215, %s214, 63
          %p217 = scmp.lt.s32.totalorder %s22, 0
          %s218 = scalar_select %p217, %s22, 0
          %s219 = sadd.s32 %s218, %s216
          %s220 = smul.addr %s219, 4
          %s221 = scalar_lea.vmem %s0, %s220
          %s222 = smul.u32 32, %s20
        $region32: #{tpu_custom_call.1} parent=27 // pred_fallthru
          _
      $region28: #{tpu_custom_call.1} parent=5 // pred_fallthru
        _
      %p223 = scmp.le.s32.totalorder 1, %s13
      %p224 = scmp.lt.s32.totalorder %s13, 3
      %p225 = pnand %p223, %p224
      %p226 = pneg %p225
      // Predicated region
      $region33: #{tpu_custom_call.1} parent=5 // pred_check
        _
      $region34: #{tpu_custom_call.1} parent=5 // pred_check_branch
        %228 = sbr.rel (%p225) target = $region36
      $region35: #{tpu_custom_call.1} parent=5 // pred_region
        %s229 = ssub.s32 %s13, 1
        %s230 = smul.u32 32, %s23
        %p231 = scmp.lt.s32.totalorder %s230, 63
        %s232 = scalar_select %p231, %s230, 63
        %p233 = scmp.lt.s32.totalorder %s25, 0
        %s234 = scalar_select %p233, %s25, 0
        %s235 = sadd.s32 %s234, %s232
        %s236 = smul.addr %s235, 4
        %s237 = scalar_lea.vmem %s0, %s236
        %p238 = pneg %p60
        %p239 = pneg %p57
        %s240 = smul.u32 5, %s25
        %p241 = scmp.lt.s32.totalorder %s240, 4
        %s242 = scalar_select %p241, %s240, 4
        %p243 = scmp.lt.s32.totalorder %s24, 0
        %s244 = scalar_select %p243, %s24, 0
        %s245 = sadd.s32 %s244, %s242
        %s246 = smul.addr %s245, 4
        %s247 = scalar_lea.vmem %s1, %s246
        %p248 = pneg %p88
        %p249 = pneg %p85
        %p250 = scmp.lt.s32.totalorder %s24, 0
        %s251 = scalar_select %p250, %s24, 0
        %s252 = scalar_lea.vmem %s2, %s251
        %p253 = pneg %p114
        %p254 = pneg %p111
        %p255 = scmp.lt.s32.totalorder %s24, 0
        %s256 = scalar_select %p255, %s24, 0
        %s257 = scalar_lea.vmem %s3, %s256
        %p258 = pneg %p140
        %p259 = pneg %p137
        %p260 = pneg %p168
        %p261 = pneg %p165
        %s262 = sand.u32 %s155, 1
        %s263 = scalar_lea.sflag [#allocation4], %s262
        %s264 = sand.u32 %s155, 1
        %s265 = smul.addr %s264, 256
        %s266 = scalar_lea.vmem [#allocation3], %s265
        %s267 = smul.u32 32, %s23
        %p268 = scmp.lt.s32.totalorder %s267, 63
        %s269 = scalar_select %p268, %s267, 63
        %p270 = scmp.lt.s32.totalorder %s25, 0
        %s271 = scalar_select %p270, %s25, 0
        %s272 = sadd.s32 %s271, %s269
        %s273 = smul.addr %s272, 4
        %s274 = scalar_lea.vmem %s0, %s273
        %s275 = smul.u32 32, %s23
        %s276 = smul.u32 5, %s25
        %p277 = scmp.lt.s32.totalorder %s276, 4
        %s278 = scalar_select %p277, %s276, 4
        %p279 = scmp.lt.s32.totalorder %s24, 0
        %s280 = scalar_select %p279, %s24, 0
        %s281 = sadd.s32 %s280, %s278
        %s282 = smul.addr %s281, 4
        %s283 = scalar_lea.vmem %s1, %s282
        %s284 = smul.u32 5, %s25
        %p285 = scmp.lt.s32.totalorder %s24, 0
        %s286 = scalar_select %p285, %s24, 0
        %s287 = scalar_lea.vmem %s2, %s286
        %p288 = scmp.lt.s32.totalorder %s24, 0
        %s289 = scalar_select %p288, %s24, 0
        %s290 = scalar_lea.vmem %s3, %s289
        %s291 = smul.u32 32, %s23
        %p293 = scmp.eq.s32.totalorder %s25, 0
        // Predicated region
        $region37: #{tpu_custom_call.1} parent=35 // pred_check
          %p294 = pneg %p293
        $region38: #{tpu_custom_call.1} parent=35 // pred_check_branch
          %296 = sbr.rel (%p294) target = $region40
        $region39: #{tpu_custom_call.1} parent=35 // pred_region
          %297 = vst [vmem:[#allocation2] sm:$0xff] 0.0
          %298 = vst [vmem:[#allocation2 + $0x8] sm:$0xff] 0.0
          %299 = vst [vmem:[#allocation2 + $0x10] sm:$0xff] 0.0
          %300 = vst [vmem:[#allocation2 + $0x18] sm:$0xff] 0.0
          %301 = vst [vmem:[#allocation2 + $0x20] sm:$0xff] 0.0
          %302 = vst [vmem:[#allocation2 + $0x28] sm:$0xff] 0.0
          %303 = vst [vmem:[#allocation2 + $0x30] sm:$0xff] 0.0
          %304 = vst [vmem:[#allocation2 + $0x38] sm:$0xff] 0.0
          %305 = vst [vmem:[#allocation2 + $0x40] sm:$0xff] 0.0
          %306 = vst [vmem:[#allocation2 + $0x48] sm:$0xff] 0.0
          %307 = vst [vmem:[#allocation2 + $0x50] sm:$0xff] 0.0
          %308 = vst [vmem:[#allocation2 + $0x58] sm:$0xff] 0.0
          %309 = vst [vmem:[#allocation2 + $0x60] sm:$0xff] 0.0
          %310 = vst [vmem:[#allocation2 + $0x68] sm:$0xff] 0.0
          %311 = vst [vmem:[#allocation2 + $0x70] sm:$0xff] 0.0
          %312 = vst [vmem:[#allocation2 + $0x78] sm:$0xff] 0.0
          %313 = vst [vmem:[#allocation2 + $0x80] sm:$0xff] 0.0
          %314 = vst [vmem:[#allocation2 + $0x88] sm:$0xff] 0.0
          %315 = vst [vmem:[#allocation2 + $0x90] sm:$0xff] 0.0
          %316 = vst [vmem:[#allocation2 + $0x98] sm:$0xff] 0.0
          %317 = vst [vmem:[#allocation2 + $0xa0] sm:$0xff] 0.0
          %318 = vst [vmem:[#allocation2 + $0xa8] sm:$0xff] 0.0
          %319 = vst [vmem:[#allocation2 + $0xb0] sm:$0xff] 0.0
          %320 = vst [vmem:[#allocation2 + $0xb8] sm:$0xff] 0.0
          %321 = vst [vmem:[#allocation2 + $0xc0] sm:$0xff] 0.0
          %322 = vst [vmem:[#allocation2 + $0xc8] sm:$0xff] 0.0
          %323 = vst [vmem:[#allocation2 + $0xd0] sm:$0xff] 0.0
          %324 = vst [vmem:[#allocation2 + $0xd8] sm:$0xff] 0.0
          %325 = vst [vmem:[#allocation2 + $0xe0] sm:$0xff] 0.0
          %326 = vst [vmem:[#allocation2 + $0xe8] sm:$0xff] 0.0
          %327 = vst [vmem:[#allocation2 + $0xf0] sm:$0xff] 0.0
          %328 = vst [vmem:[#allocation2 + $0xf8] sm:$0xff] 0.0
        $region40: #{tpu_custom_call.1} parent=35 // pred_fallthru
          _
        %v329 = vld [vmem:[#allocation2] sm:$0xff]
        %v330 = vld [vmem:[#allocation2 + $0x8] sm:$0xff]
        %v331 = vld [vmem:[#allocation2 + $0x10] sm:$0xff]
        %v332 = vld [vmem:[#allocation2 + $0x18] sm:$0xff]
        %v333 = vld [vmem:[#allocation2 + $0x20] sm:$0xff]
        %v334 = vld [vmem:[#allocation2 + $0x28] sm:$0xff]
        %v335 = vld [vmem:[#allocation2 + $0x30] sm:$0xff]
        %v336 = vld [vmem:[#allocation2 + $0x38] sm:$0xff]
        %v337 = vld [vmem:[#allocation2 + $0x40] sm:$0xff]
        %v338 = vld [vmem:[#allocation2 + $0x48] sm:$0xff]
        %v339 = vld [vmem:[#allocation2 + $0x50] sm:$0xff]
        %v340 = vld [vmem:[#allocation2 + $0x58] sm:$0xff]
        %v341 = vld [vmem:[#allocation2 + $0x60] sm:$0xff]
        %v342 = vld [vmem:[#allocation2 + $0x68] sm:$0xff]
        %v343 = vld [vmem:[#allocation2 + $0x70] sm:$0xff]
        %v344 = vld [vmem:[#allocation2 + $0x78] sm:$0xff]
        %v345 = vld [vmem:[#allocation2 + $0x80] sm:$0xff]
        %v346 = vld [vmem:[#allocation2 + $0x88] sm:$0xff]
        %v347 = vld [vmem:[#allocation2 + $0x90] sm:$0xff]
        %v348 = vld [vmem:[#allocation2 + $0x98] sm:$0xff]
        %v349 = vld [vmem:[#allocation2 + $0xa0] sm:$0xff]
        %v350 = vld [vmem:[#allocation2 + $0xa8] sm:$0xff]
        %v351 = vld [vmem:[#allocation2 + $0xb0] sm:$0xff]
        %v352 = vld [vmem:[#allocation2 + $0xb8] sm:$0xff]
        %v353 = vld [vmem:[#allocation2 + $0xc0] sm:$0xff]
        %v354 = vld [vmem:[#allocation2 + $0xc8] sm:$0xff]
        %v355 = vld [vmem:[#allocation2 + $0xd0] sm:$0xff]
        %v356 = vld [vmem:[#allocation2 + $0xd8] sm:$0xff]
        %v357 = vld [vmem:[#allocation2 + $0xe0] sm:$0xff]
        %v358 = vld [vmem:[#allocation2 + $0xe8] sm:$0xff]
        %v359 = vld [vmem:[#allocation2 + $0xf0] sm:$0xff]
        %v360 = vld [vmem:[#allocation2 + $0xf8] sm:$0xff]
        %v361 = vld [vmem:[%s274] sm:$0xf]
        %v362 = vld [vmem:[%s274 + $0x4] sm:$0xf]
        %v363 = vld [vmem:[%s274 + $0x8] sm:$0xf]
        %v364 = vld [vmem:[%s274 + $0xc] sm:$0xf]
        %v365 = vld [vmem:[%s274 + $0x10] sm:$0xf]
        %v366 = vld [vmem:[%s274 + $0x14] sm:$0xf]
        %v367 = vld [vmem:[%s274 + $0x18] sm:$0xf]
        %v368 = vld [vmem:[%s274 + $0x1c] sm:$0xf]
        %v369 = vld [vmem:[%s274 + $0x20] sm:$0xf]
        %v370 = vld [vmem:[%s274 + $0x24] sm:$0xf]
        %v371 = vld [vmem:[%s274 + $0x28] sm:$0xf]
        %v372 = vld [vmem:[%s274 + $0x2c] sm:$0xf]
        %v373 = vld [vmem:[%s274 + $0x30] sm:$0xf]
        %v374 = vld [vmem:[%s274 + $0x34] sm:$0xf]
        %v375 = vld [vmem:[%s274 + $0x38] sm:$0xf]
        %v376 = vld [vmem:[%s274 + $0x3c] sm:$0xf]
        %v377 = vld [vmem:[%s274 + $0x40] sm:$0xf]
        %v378 = vld [vmem:[%s274 + $0x44] sm:$0xf]
        %v379 = vld [vmem:[%s274 + $0x48] sm:$0xf]
        %v380 = vld [vmem:[%s274 + $0x4c] sm:$0xf]
        %v381 = vld [vmem:[%s274 + $0x50] sm:$0xf]
        %v382 = vld [vmem:[%s274 + $0x54] sm:$0xf]
        %v383 = vld [vmem:[%s274 + $0x58] sm:$0xf]
        %v384 = vld [vmem:[%s274 + $0x5c] sm:$0xf]
        %v385 = vld [vmem:[%s274 + $0x60] sm:$0xf]
        %v386 = vld [vmem:[%s274 + $0x64] sm:$0xf]
        %v387 = vld [vmem:[%s274 + $0x68] sm:$0xf]
        %v388 = vld [vmem:[%s274 + $0x6c] sm:$0xf]
        %v389 = vld [vmem:[%s274 + $0x70] sm:$0xf]
        %v390 = vld [vmem:[%s274 + $0x74] sm:$0xf]
        %v391 = vld [vmem:[%s274 + $0x78] sm:$0xf]
        %v392 = vld [vmem:[%s274 + $0x7c] sm:$0xf]
        %v393 = vld [vmem:[%s283] sm:$0xf]
        %v394 = vld [vmem:[%s283 + $0x4] sm:$0xf]
        %v395 = vld [vmem:[%s283 + $0x8] sm:$0xf]
        %v396 = vld [vmem:[%s283 + $0xc] sm:$0xf]
        %v397 = vld [vmem:[%s283 + $0x10] sm:$0x3]
        %v430 = vunpack.c.l.b16 %v361
        %v431 = vunpack.c.l.b16 %v362
        %v432 = vunpack.c.l.b16 %v363
        %v433 = vunpack.c.l.b16 %v364
        %v434 = vunpack.c.l.b16 %v365
        %v435 = vunpack.c.l.b16 %v366
        %v436 = vunpack.c.l.b16 %v367
        %v437 = vunpack.c.l.b16 %v368
        %v438 = vunpack.c.l.b16 %v369
        %v439 = vunpack.c.l.b16 %v370
        %v440 = vunpack.c.l.b16 %v371
        %v441 = vunpack.c.l.b16 %v372
        %v442 = vunpack.c.l.b16 %v373
        %v443 = vunpack.c.l.b16 %v374
        %v444 = vunpack.c.l.b16 %v375
        %v445 = vunpack.c.l.b16 %v376
        %v446 = vunpack.c.l.b16 %v377
        %v447 = vunpack.c.l.b16 %v378
        %v448 = vunpack.c.l.b16 %v379
        %v449 = vunpack.c.l.b16 %v380
        %v450 = vunpack.c.l.b16 %v381
        %v451 = vunpack.c.l.b16 %v382
        %v452 = vunpack.c.l.b16 %v383
        %v453 = vunpack.c.l.b16 %v384
        %v454 = vunpack.c.l.b16 %v385
        %v455 = vunpack.c.l.b16 %v386
        %v456 = vunpack.c.l.b16 %v387
        %v457 = vunpack.c.l.b16 %v388
        %v458 = vunpack.c.l.b16 %v389
        %v459 = vunpack.c.l.b16 %v390
        %v460 = vunpack.c.l.b16 %v391
        %v461 = vunpack.c.l.b16 %v392
        %v462 = vpack.c.b16 %v431, %v430
        %v463 = vpack.c.b16 %v433, %v432
        %v464 = vpack.c.b16 %v435, %v434
        %v465 = vpack.c.b16 %v437, %v436
        %v466 = vpack.c.b16 %v439, %v438
        %v467 = vpack.c.b16 %v441, %v440
        %v468 = vpack.c.b16 %v443, %v442
        %v469 = vpack.c.b16 %v445, %v444
        %v470 = vpack.c.b16 %v447, %v446
        %v471 = vpack.c.b16 %v449, %v448
        %v472 = vpack.c.b16 %v451, %v450
        %v473 = vpack.c.b16 %v453, %v452
        %v474 = vpack.c.b16 %v455, %v454
        %v475 = vpack.c.b16 %v457, %v456
        %v476 = vpack.c.b16 %v459, %v458
        %v477 = vpack.c.b16 %v461, %v460
        %v483 = vunpack.c.l.b16 %v393
        %v484 = vunpack.c.l.b16 %v394
        %v485 = vunpack.c.l.b16 %v395
        %v486 = vunpack.c.l.b16 %v396
        %v487 = vunpack.c.l.b16 %v397
        %v488 = vpack.c.b16 %v484, %v483
        %v489 = vpack.c.b16 %v486, %v485
        %v490 = vpack.c.b16 %v487, %v487
        %vm493 = vcmask 293888
        %v495 = vsel %vm493, %v462, 0
        %v498 = vsel %vm493, %v463, 0
        %v501 = vsel %vm493, %v464, 0
        %v504 = vsel %vm493, %v465, 0
        %v507 = vsel %vm493, %v466, 0
        %v510 = vsel %vm493, %v467, 0
        %v513 = vsel %vm493, %v468, 0
        %v516 = vsel %vm493, %v469, 0
        %v519 = vsel %vm493, %v470, 0
        %v522 = vsel %vm493, %v471, 0
        %v525 = vsel %vm493, %v472, 0
        %v528 = vsel %vm493, %v473, 0
        %v531 = vsel %vm493, %v474, 0
        %v534 = vsel %vm493, %v475, 0
        %v537 = vsel %vm493, %v476, 0
        %v540 = vsel %vm493, %v477, 0
        %vm542 = vcmask 1041408
        %v544 = vsel %vm542, %v490, 0
        %546 = vmatpush.bf16.msra.mxu0 0
        %547 = vmatpush.bf16.msra.mxu0 0
        %548 = vmatpush.bf16.msra.mxu0 0
        %549 = vmatpush.bf16.msra.mxu0 0
        %550 = vmatpush.bf16.msra.mxu0 0
        %551 = vmatpush.bf16.msra.mxu0 %v544
        %552 = vmatpush.bf16.msra.mxu0 %v489
        %553 = vmatpush.bf16.msra.mxu0 %v488
        %554 = vmatmul.bf16.gmra.mxu0 %v495
        %v555 = vpop.f32.mrf.mxu0
        %v556 = vadd.f32 0.0, %v555
        %v557 = vpop.f32.mrf.mxu0
        %v558 = vadd.f32 0.0, %v557
        %559 = vmatmul.bf16.gmra.mxu0 %v498
        %v560 = vpop.f32.mrf.mxu0
        %v561 = vadd.f32 0.0, %v560
        %v562 = vpop.f32.mrf.mxu0
        %v563 = vadd.f32 0.0, %v562
        %564 = vmatmul.bf16.gmra.mxu0 %v501
        %v565 = vpop.f32.mrf.mxu0
        %v566 = vadd.f32 0.0, %v565
        %v567 = vpop.f32.mrf.mxu0
        %v568 = vadd.f32 0.0, %v567
        %569 = vmatmul.bf16.gmra.mxu0 %v504
        %v570 = vpop.f32.mrf.mxu0
        %v571 = vadd.f32 0.0, %v570
        %v572 = vpop.f32.mrf.mxu0
        %v573 = vadd.f32 0.0, %v572
        %574 = vmatmul.bf16.gmra.mxu0 %v507
        %v575 = vpop.f32.mrf.mxu0
        %v576 = vadd.f32 0.0, %v575
        %v577 = vpop.f32.mrf.mxu0
        %v578 = vadd.f32 0.0, %v577
        %579 = vmatmul.bf16.gmra.mxu0 %v510
        %v580 = vpop.f32.mrf.mxu0
        %v581 = vadd.f32 0.0, %v580
        %v582 = vpop.f32.mrf.mxu0
        %v583 = vadd.f32 0.0, %v582
        %584 = vmatmul.bf16.gmra.mxu0 %v513
        %v585 = vpop.f32.mrf.mxu0
        %v586 = vadd.f32 0.0, %v585
        %v587 = vpop.f32.mrf.mxu0
        %v588 = vadd.f32 0.0, %v587
        %589 = vmatmul.bf16.gmra.mxu0 %v516
        %v590 = vpop.f32.mrf.mxu0
        %v591 = vadd.f32 0.0, %v590
        %v592 = vpop.f32.mrf.mxu0
        %v593 = vadd.f32 0.0, %v592
        %594 = vmatmul.bf16.gmra.mxu0 %v519
        %v595 = vpop.f32.mrf.mxu0
        %v596 = vadd.f32 0.0, %v595
        %v597 = vpop.f32.mrf.mxu0
        %v598 = vadd.f32 0.0, %v597
        %599 = vmatmul.bf16.gmra.mxu0 %v522
        %v600 = vpop.f32.mrf.mxu0
        %v601 = vadd.f32 0.0, %v600
        %v602 = vpop.f32.mrf.mxu0
        %v603 = vadd.f32 0.0, %v602
        %604 = vmatmul.bf16.gmra.mxu0 %v525
        %v605 = vpop.f32.mrf.mxu0
        %v606 = vadd.f32 0.0, %v605
        %v607 = vpop.f32.mrf.mxu0
        %v608 = vadd.f32 0.0, %v607
        %609 = vmatmul.bf16.gmra.mxu0 %v528
        %v610 = vpop.f32.mrf.mxu0
        %v611 = vadd.f32 0.0, %v610
        %v612 = vpop.f32.mrf.mxu0
        %v613 = vadd.f32 0.0, %v612
        %614 = vmatmul.bf16.gmra.mxu0 %v531
        %v615 = vpop.f32.mrf.mxu0
        %v616 = vadd.f32 0.0, %v615
        %v617 = vpop.f32.mrf.mxu0
        %v618 = vadd.f32 0.0, %v617
        %619 = vmatmul.bf16.gmra.mxu0 %v534
        %v620 = vpop.f32.mrf.mxu0
        %v621 = vadd.f32 0.0, %v620
        %v622 = vpop.f32.mrf.mxu0
        %v623 = vadd.f32 0.0, %v622
        %624 = vmatmul.bf16.gmra.mxu0 %v537
        %v625 = vpop.f32.mrf.mxu0
        %v626 = vadd.f32 0.0, %v625
        %v627 = vpop.f32.mrf.mxu0
        %v628 = vadd.f32 0.0, %v627
        %629 = vmatmul.bf16.gmra.mxu0 %v540
        %v630 = vpop.f32.mrf.mxu0
        %v631 = vadd.f32 0.0, %v630
        %v632 = vpop.f32.mrf.mxu0
        %v633 = vadd.f32 0.0, %v632
        %634 = vdwg.mxu0
        %v635 = vadd.f32 %v329, %v556
        %v636 = vadd.f32 %v330, %v558
        %v637 = vadd.f32 %v331, %v561
        %v638 = vadd.f32 %v332, %v563
        %v639 = vadd.f32 %v333, %v566
        %v640 = vadd.f32 %v334, %v568
        %v641 = vadd.f32 %v335, %v571
        %v642 = vadd.f32 %v336, %v573
        %v643 = vadd.f32 %v337, %v576
        %v644 = vadd.f32 %v338, %v578
        %v645 = vadd.f32 %v339, %v581
        %v646 = vadd.f32 %v340, %v583
        %v647 = vadd.f32 %v341, %v586
        %v648 = vadd.f32 %v342, %v588
        %v649 = vadd.f32 %v343, %v591
        %v650 = vadd.f32 %v344, %v593
        %v651 = vadd.f32 %v345, %v596
        %v652 = vadd.f32 %v346, %v598
        %v653 = vadd.f32 %v347, %v601
        %v654 = vadd.f32 %v348, %v603
        %v655 = vadd.f32 %v349, %v606
        %v656 = vadd.f32 %v350, %v608
        %v657 = vadd.f32 %v351, %v611
        %v658 = vadd.f32 %v352, %v613
        %v659 = vadd.f32 %v353, %v616
        %v660 = vadd.f32 %v354, %v618
        %v661 = vadd.f32 %v355, %v621
        %v662 = vadd.f32 %v356, %v623
        %v663 = vadd.f32 %v357, %v626
        %v664 = vadd.f32 %v358, %v628
        %v665 = vadd.f32 %v359, %v631
        %v666 = vadd.f32 %v360, %v633
        %667 = vst [vmem:[#allocation2] sm:$0xff] %v635
        %668 = vst [vmem:[#allocation2 + $0x8] sm:$0xff] %v636
        %669 = vst [vmem:[#allocation2 + $0x10] sm:$0xff] %v637
        %670 = vst [vmem:[#allocation2 + $0x18] sm:$0xff] %v638
        %671 = vst [vmem:[#allocation2 + $0x20] sm:$0xff] %v639
        %672 = vst [vmem:[#allocation2 + $0x28] sm:$0xff] %v640
        %673 = vst [vmem:[#allocation2 + $0x30] sm:$0xff] %v641
        %674 = vst [vmem:[#allocation2 + $0x38] sm:$0xff] %v642
        %675 = vst [vmem:[#allocation2 + $0x40] sm:$0xff] %v643
        %676 = vst [vmem:[#allocation2 + $0x48] sm:$0xff] %v644
        %677 = vst [vmem:[#allocation2 + $0x50] sm:$0xff] %v645
        %678 = vst [vmem:[#allocation2 + $0x58] sm:$0xff] %v646
        %679 = vst [vmem:[#allocation2 + $0x60] sm:$0xff] %v647
        %680 = vst [vmem:[#allocation2 + $0x68] sm:$0xff] %v648
        %681 = vst [vmem:[#allocation2 + $0x70] sm:$0xff] %v649
        %682 = vst [vmem:[#allocation2 + $0x78] sm:$0xff] %v650
        %683 = vst [vmem:[#allocation2 + $0x80] sm:$0xff] %v651
        %684 = vst [vmem:[#allocation2 + $0x88] sm:$0xff] %v652
        %685 = vst [vmem:[#allocation2 + $0x90] sm:$0xff] %v653
        %686 = vst [vmem:[#allocation2 + $0x98] sm:$0xff] %v654
        %687 = vst [vmem:[#allocation2 + $0xa0] sm:$0xff] %v655
        %688 = vst [vmem:[#allocation2 + $0xa8] sm:$0xff] %v656
        %689 = vst [vmem:[#allocation2 + $0xb0] sm:$0xff] %v657
        %690 = vst [vmem:[#allocation2 + $0xb8] sm:$0xff] %v658
        %691 = vst [vmem:[#allocation2 + $0xc0] sm:$0xff] %v659
        %692 = vst [vmem:[#allocation2 + $0xc8] sm:$0xff] %v660
        %693 = vst [vmem:[#allocation2 + $0xd0] sm:$0xff] %v661
        %694 = vst [vmem:[#allocation2 + $0xd8] sm:$0xff] %v662
        %695 = vst [vmem:[#allocation2 + $0xe0] sm:$0xff] %v663
        %696 = vst [vmem:[#allocation2 + $0xe8] sm:$0xff] %v664
        %697 = vst [vmem:[#allocation2 + $0xf0] sm:$0xff] %v665
        %698 = vst [vmem:[#allocation2 + $0xf8] sm:$0xff] %v666
        // Predicated region
        $region41: #{tpu_custom_call.1} parent=35 // pred_check
          %p699 = pneg %p293
        $region42: #{tpu_custom_call.1} parent=35 // pred_check_branch
          %701 = sbr.rel (%p699) target = $region44
        $region43: #{tpu_custom_call.1} parent=35 // pred_region
          %v702 = vld [vmem:[#allocation2] sm:$0xff]
          %v703 = vld [vmem:[#allocation2 + $0x8] sm:$0xff]
          %v704 = vld [vmem:[#allocation2 + $0x10] sm:$0xff]
          %v705 = vld [vmem:[#allocation2 + $0x18] sm:$0xff]
          %v706 = vld [vmem:[#allocation2 + $0x20] sm:$0xff]
          %v707 = vld [vmem:[#allocation2 + $0x28] sm:$0xff]
          %v708 = vld [vmem:[#allocation2 + $0x30] sm:$0xff]
          %v709 = vld [vmem:[#allocation2 + $0x38] sm:$0xff]
          %v710 = vld [vmem:[#allocation2 + $0x40] sm:$0xff]
          %v711 = vld [vmem:[#allocation2 + $0x48] sm:$0xff]
          %v712 = vld [vmem:[#allocation2 + $0x50] sm:$0xff]
          %v713 = vld [vmem:[#allocation2 + $0x58] sm:$0xff]
          %v714 = vld [vmem:[#allocation2 + $0x60] sm:$0xff]
          %v715 = vld [vmem:[#allocation2 + $0x68] sm:$0xff]
          %v716 = vld [vmem:[#allocation2 + $0x70] sm:$0xff]
          %v717 = vld [vmem:[#allocation2 + $0x78] sm:$0xff]
          %v718 = vld [vmem:[#allocation2 + $0x80] sm:$0xff]
          %v719 = vld [vmem:[#allocation2 + $0x88] sm:$0xff]
          %v720 = vld [vmem:[#allocation2 + $0x90] sm:$0xff]
          %v721 = vld [vmem:[#allocation2 + $0x98] sm:$0xff]
          %v722 = vld [vmem:[#allocation2 + $0xa0] sm:$0xff]
          %v723 = vld [vmem:[#allocation2 + $0xa8] sm:$0xff]
          %v724 = vld [vmem:[#allocation2 + $0xb0] sm:$0xff]
          %v725 = vld [vmem:[#allocation2 + $0xb8] sm:$0xff]
          %v726 = vld [vmem:[#allocation2 + $0xc0] sm:$0xff]
          %v727 = vld [vmem:[#allocation2 + $0xc8] sm:$0xff]
          %v728 = vld [vmem:[#allocation2 + $0xd0] sm:$0xff]
          %v729 = vld [vmem:[#allocation2 + $0xd8] sm:$0xff]
          %v730 = vld [vmem:[#allocation2 + $0xe0] sm:$0xff]
          %v731 = vld [vmem:[#allocation2 + $0xe8] sm:$0xff]
          %v732 = vld [vmem:[#allocation2 + $0xf0] sm:$0xff]
          %v733 = vld [vmem:[#allocation2 + $0xf8] sm:$0xff]
          %v734 = vld [vmem:[%s287] sm:$0x1]
          %v736 = vperm.slane %v734, 0
          %v738 = vmul.f32 %v702, %v736
          %v739 = vmul.f32 %v703, %v736
          %v740 = vmul.f32 %v704, %v736
          %v741 = vmul.f32 %v705, %v736
          %v742 = vmul.f32 %v706, %v736
          %v743 = vmul.f32 %v707, %v736
          %v744 = vmul.f32 %v708, %v736
          %v745 = vmul.f32 %v709, %v736
          %v746 = vmul.f32 %v710, %v736
          %v747 = vmul.f32 %v711, %v736
          %v748 = vmul.f32 %v712, %v736
          %v749 = vmul.f32 %v713, %v736
          %v750 = vmul.f32 %v714, %v736
          %v751 = vmul.f32 %v715, %v736
          %v752 = vmul.f32 %v716, %v736
          %v753 = vmul.f32 %v717, %v736
          %v754 = vmul.f32 %v718, %v736
          %v755 = vmul.f32 %v719, %v736
          %v756 = vmul.f32 %v720, %v736
          %v757 = vmul.f32 %v721, %v736
          %v758 = vmul.f32 %v722, %v736
          %v759 = vmul.f32 %v723, %v736
          %v760 = vmul.f32 %v724, %v736
          %v761 = vmul.f32 %v725, %v736
          %v762 = vmul.f32 %v726, %v736
          %v763 = vmul.f32 %v727, %v736
          %v764 = vmul.f32 %v728, %v736
          %v765 = vmul.f32 %v729, %v736
          %v766 = vmul.f32 %v730, %v736
          %v767 = vmul.f32 %v731, %v736
          %v768 = vmul.f32 %v732, %v736
          %v769 = vmul.f32 %v733, %v736
          %v770 = vld [vmem:[%s290] sm:$0x1]
          %v772 = vperm.slane %v770, 0
          %v774 = vadd.f32 %v738, %v772
          %v775 = vadd.f32 %v739, %v772
          %v776 = vadd.f32 %v740, %v772
          %v777 = vadd.f32 %v741, %v772
          %v778 = vadd.f32 %v742, %v772
          %v779 = vadd.f32 %v743, %v772
          %v780 = vadd.f32 %v744, %v772
          %v781 = vadd.f32 %v745, %v772
          %v782 = vadd.f32 %v746, %v772
          %v783 = vadd.f32 %v747, %v772
          %v784 = vadd.f32 %v748, %v772
          %v785 = vadd.f32 %v749, %v772
          %v786 = vadd.f32 %v750, %v772
          %v787 = vadd.f32 %v751, %v772
          %v788 = vadd.f32 %v752, %v772
          %v789 = vadd.f32 %v753, %v772
          %v790 = vadd.f32 %v754, %v772
          %v791 = vadd.f32 %v755, %v772
          %v792 = vadd.f32 %v756, %v772
          %v793 = vadd.f32 %v757, %v772
          %v794 = vadd.f32 %v758, %v772
          %v795 = vadd.f32 %v759, %v772
          %v796 = vadd.f32 %v760, %v772
          %v797 = vadd.f32 %v761, %v772
          %v798 = vadd.f32 %v762, %v772
          %v799 = vadd.f32 %v763, %v772
          %v800 = vadd.f32 %v764, %v772
          %v801 = vadd.f32 %v765, %v772
          %v802 = vadd.f32 %v766, %v772
          %v803 = vadd.f32 %v767, %v772
          %v804 = vadd.f32 %v768, %v772
          %v805 = vadd.f32 %v769, %v772
          %vm806 = vcmp.gt.f32.partialorder %v774, 0.0
          %vm807 = vcmp.gt.f32.partialorder %v775, 0.0
          %vm808 = vcmp.gt.f32.partialorder %v776, 0.0
          %vm809 = vcmp.gt.f32.partialorder %v777, 0.0
          %vm810 = vcmp.gt.f32.partialorder %v778, 0.0
          %vm811 = vcmp.gt.f32.partialorder %v779, 0.0
          %vm812 = vcmp.gt.f32.partialorder %v780, 0.0
          %vm813 = vcmp.gt.f32.partialorder %v781, 0.0
          %vm814 = vcmp.gt.f32.partialorder %v782, 0.0
          %vm815 = vcmp.gt.f32.partialorder %v783, 0.0
          %vm816 = vcmp.gt.f32.partialorder %v784, 0.0
          %vm817 = vcmp.gt.f32.partialorder %v785, 0.0
          %vm818 = vcmp.gt.f32.partialorder %v786, 0.0
          %vm819 = vcmp.gt.f32.partialorder %v787, 0.0
          %vm820 = vcmp.gt.f32.partialorder %v788, 0.0
          %vm821 = vcmp.gt.f32.partialorder %v789, 0.0
          %vm822 = vcmp.gt.f32.partialorder %v790, 0.0
          %vm823 = vcmp.gt.f32.partialorder %v791, 0.0
          %vm824 = vcmp.gt.f32.partialorder %v792, 0.0
          %vm825 = vcmp.gt.f32.partialorder %v793, 0.0
          %vm826 = vcmp.gt.f32.partialorder %v794, 0.0
          %vm827 = vcmp.gt.f32.partialorder %v795, 0.0
          %vm828 = vcmp.gt.f32.partialorder %v796, 0.0
          %vm829 = vcmp.gt.f32.partialorder %v797, 0.0
          %vm830 = vcmp.gt.f32.partialorder %v798, 0.0
          %vm831 = vcmp.gt.f32.partialorder %v799, 0.0
          %vm832 = vcmp.gt.f32.partialorder %v800, 0.0
          %vm833 = vcmp.gt.f32.partialorder %v801, 0.0
          %vm834 = vcmp.gt.f32.partialorder %v802, 0.0
          %vm835 = vcmp.gt.f32.partialorder %v803, 0.0
          %vm836 = vcmp.gt.f32.partialorder %v804, 0.0
          %vm837 = vcmp.gt.f32.partialorder %v805, 0.0
          %v838 = vmul.f32 %v774, 0.01
          %v839 = vmul.f32 %v775, 0.01
          %v840 = vmul.f32 %v776, 0.01
          %v841 = vmul.f32 %v777, 0.01
          %v842 = vmul.f32 %v778, 0.01
          %v843 = vmul.f32 %v779, 0.01
          %v844 = vmul.f32 %v780, 0.01
          %v845 = vmul.f32 %v781, 0.01
          %v846 = vmul.f32 %v782, 0.01
          %v847 = vmul.f32 %v783, 0.01
          %v848 = vmul.f32 %v784, 0.01
          %v849 = vmul.f32 %v785, 0.01
          %v850 = vmul.f32 %v786, 0.01
          %v851 = vmul.f32 %v787, 0.01
          %v852 = vmul.f32 %v788, 0.01
          %v853 = vmul.f32 %v789, 0.01
          %v854 = vmul.f32 %v790, 0.01
          %v855 = vmul.f32 %v791, 0.01
          %v856 = vmul.f32 %v792, 0.01
          %v857 = vmul.f32 %v793, 0.01
          %v858 = vmul.f32 %v794, 0.01
          %v859 = vmul.f32 %v795, 0.01
          %v860 = vmul.f32 %v796, 0.01
          %v861 = vmul.f32 %v797, 0.01
          %v862 = vmul.f32 %v798, 0.01
          %v863 = vmul.f32 %v799, 0.01
          %v864 = vmul.f32 %v800, 0.01
          %v865 = vmul.f32 %v801, 0.01
          %v866 = vmul.f32 %v802, 0.01
          %v867 = vmul.f32 %v803, 0.01
          %v868 = vmul.f32 %v804, 0.01
          %v869 = vmul.f32 %v805, 0.01
          %v870 = vsel %vm806, %v774, %v838
          %v871 = vsel %vm807, %v775, %v839
          %v872 = vsel %vm808, %v776, %v840
          %v873 = vsel %vm809, %v777, %v841
          %v874 = vsel %vm810, %v778, %v842
          %v875 = vsel %vm811, %v779, %v843
          %v876 = vsel %vm812, %v780, %v844
          %v877 = vsel %vm813, %v781, %v845
          %v878 = vsel %vm814, %v782, %v846
          %v879 = vsel %vm815, %v783, %v847
          %v880 = vsel %vm816, %v784, %v848
          %v881 = vsel %vm817, %v785, %v849
          %v882 = vsel %vm818, %v786, %v850
          %v883 = vsel %vm819, %v787, %v851
          %v884 = vsel %vm820, %v788, %v852
          %v885 = vsel %vm821, %v789, %v853
          %v886 = vsel %vm822, %v790, %v854
          %v887 = vsel %vm823, %v791, %v855
          %v888 = vsel %vm824, %v792, %v856
          %v889 = vsel %vm825, %v793, %v857
          %v890 = vsel %vm826, %v794, %v858
          %v891 = vsel %vm827, %v795, %v859
          %v892 = vsel %vm828, %v796, %v860
          %v893 = vsel %vm829, %v797, %v861
          %v894 = vsel %vm830, %v798, %v862
          %v895 = vsel %vm831, %v799, %v863
          %v896 = vsel %vm832, %v800, %v864
          %v897 = vsel %vm833, %v801, %v865
          %v898 = vsel %vm834, %v802, %v866
          %v899 = vsel %vm835, %v803, %v867
          %v900 = vsel %vm836, %v804, %v868
          %v901 = vsel %vm837, %v805, %v869
          %902 = vst [vmem:[%s266] sm:$0xff] %v870
          %903 = vst [vmem:[%s266 + $0x8] sm:$0xff] %v871
          %904 = vst [vmem:[%s266 + $0x10] sm:$0xff] %v872
          %905 = vst [vmem:[%s266 + $0x18] sm:$0xff] %v873
          %906 = vst [vmem:[%s266 + $0x20] sm:$0xff] %v874
          %907 = vst [vmem:[%s266 + $0x28] sm:$0xff] %v875
          %908 = vst [vmem:[%s266 + $0x30] sm:$0xff] %v876
          %909 = vst [vmem:[%s266 + $0x38] sm:$0xff] %v877
          %910 = vst [vmem:[%s266 + $0x40] sm:$0xff] %v878
          %911 = vst [vmem:[%s266 + $0x48] sm:$0xff] %v879
          %912 = vst [vmem:[%s266 + $0x50] sm:$0xff] %v880
          %913 = vst [vmem:[%s266 + $0x58] sm:$0xff] %v881
          %914 = vst [vmem:[%s266 + $0x60] sm:$0xff] %v882
          %915 = vst [vmem:[%s266 + $0x68] sm:$0xff] %v883
          %916 = vst [vmem:[%s266 + $0x70] sm:$0xff] %v884
          %917 = vst [vmem:[%s266 + $0x78] sm:$0xff] %v885
          %918 = vst [vmem:[%s266 + $0x80] sm:$0xff] %v886
          %919 = vst [vmem:[%s266 + $0x88] sm:$0xff] %v887
          %920 = vst [vmem:[%s266 + $0x90] sm:$0xff] %v888
          %921 = vst [vmem:[%s266 + $0x98] sm:$0xff] %v889
          %922 = vst [vmem:[%s266 + $0xa0] sm:$0xff] %v890
          %923 = vst [vmem:[%s266 + $0xa8] sm:$0xff] %v891
          %924 = vst [vmem:[%s266 + $0xb0] sm:$0xff] %v892
          %925 = vst [vmem:[%s266 + $0xb8] sm:$0xff] %v893
          %926 = vst [vmem:[%s266 + $0xc0] sm:$0xff] %v894
          %927 = vst [vmem:[%s266 + $0xc8] sm:$0xff] %v895
          %928 = vst [vmem:[%s266 + $0xd0] sm:$0xff] %v896
          %929 = vst [vmem:[%s266 + $0xd8] sm:$0xff] %v897
          %930 = vst [vmem:[%s266 + $0xe0] sm:$0xff] %v898
          %931 = vst [vmem:[%s266 + $0xe8] sm:$0xff] %v899
          %932 = vst [vmem:[%s266 + $0xf0] sm:$0xff] %v900
          %933 = vst [vmem:[%s266 + $0xf8] sm:$0xff] %v901
        $region44: #{tpu_custom_call.1} parent=35 // pred_fallthru
          _
        %s934 = sand.u32 %s155, 1
        %s935 = scalar_lea.sflag [#allocation4], %s934
        %s936 = sand.u32 %s155, 1
        %s937 = smul.addr %s936, 256
        %s938 = scalar_lea.vmem [#allocation3], %s937
        // Predicated region
        $region45: #{tpu_custom_call.1} parent=35 // pred_check
          %p939 = pneg %p165
        $region46: #{tpu_custom_call.1} parent=35 // pred_check_branch
          %941 = sbr.rel (%p939) target = $region48
        $region47: #{tpu_custom_call.1} parent=35 // pred_region
          %s942 = smul.u32 32, %s23
          %944 = vsyncadd %s935, 0
          %s945 = sadd.s32 %s24, %s942
          %s946 = smul.addr %s945, 8
          %s947 = scalar_lea.hbm %s4, %s946
          %s948 = sshll.u32 %s938, 4
          %s949 = int_to_ptr.vmem [resolvable:$true] %s948
          %s950 = sshll.u32 %s947, 4
          %s951 = int_to_ptr.hbm [resolvable:$true] %s950
          %956 = dma.vmem_to_hbm [thread:$0]  %s949, 4096, %s951, %s935, 128, 128, 8
        $region48: #{tpu_custom_call.1} parent=35 // pred_fallthru
          _
      $region36: #{tpu_custom_call.1} parent=5 // pred_fallthru
        _
      %p957 = scmp.le.s32.totalorder 2, %s13
      // Predicated region
      $region49: #{tpu_custom_call.1} parent=5 // pred_check
        %p958 = pneg %p957
      $region50: #{tpu_custom_call.1} parent=5 // pred_check_branch
        %960 = sbr.rel (%p958) target = $region52
      $region51: #{tpu_custom_call.1} parent=5 // pred_region
        %s961 = ssub.s32 %s13, 2
        // Predicated region
        $region53: #{tpu_custom_call.1} parent=51 // pred_check
          %p962 = pneg %p171
        $region54: #{tpu_custom_call.1} parent=51 // pred_check_branch
          %964 = sbr.rel (%p962) target = $region56
        $region55: #{tpu_custom_call.1} parent=51 // pred_region
          %s965 = sand.u32 %s156, 1
          %s966 = scalar_lea.sflag [#allocation4], %s965
          %s967 = sand.u32 %s156, 1
          %s968 = smul.addr %s967, 256
          %s969 = scalar_lea.vmem [#allocation3], %s968
          %971 = dma.done %s966, 4096
        $region56: #{tpu_custom_call.1} parent=51 // pred_fallthru
          _
      $region52: #{tpu_custom_call.1} parent=5 // pred_fallthru
        _
    $region6: #{tpu_custom_call.1} parent=1 // loop_footer
      %s17 = sadd.s32 1, %s13
    $region7: #{tpu_custom_call.1} parent=1 // loop_footer_branch
      %12 = sbr.rel target = $region3
    $region8: #{tpu_custom_call.1} parent=1 // loop_exit
      _
    %972 = vsyncpa [#allocation4], 1
    %s973 = scalar_lea.sflag [#allocation4], 1
    %974 = vsyncpa %s973, 1

</llo_original>
